<compile_context>
chip_gen: v7x
topology: tpu7x:2x2x1
jax: 0.10.0
libtpu: 0.0.40
codegen_flags: <defaults>
</compile_context>

<pallas_src>
import functools

import numpy as np
import jax
import jax.numpy as jnp
from jax.experimental import pallas as pl
from jax.experimental.pallas import tpu as pltpu

_VMEM_LIMIT = 32 * 1024 * 1024  # explicit budget; safe under v7x 64 MiB physical VMEM


# ----------------------------------------------------------------------------
# Kernel 1: jagged sum-pooling (one-hot matmul on the MXU) fused with the
# pooled-sparse -> hidden projection.  Emits the (1, H) sparse bias
#   sparse_bias = b1 + sum_k pooled[k] @ W1_sparse[k*E:(k+1)*E]
# so the batch-tiled MLP kernel never touches the sparse features again.
# ----------------------------------------------------------------------------
def _pool_project_kernel(seg_ref, emb_ref, w1s_ref, b1_ref, out_ref, *, num_keys):
    total_len, emb_dim = emb_ref.shape
    key_iota = jax.lax.broadcasted_iota(jnp.int32, (num_keys, total_len), 0)
    onehot = (key_iota == seg_ref[...]).astype(jnp.float32)            # (K, L)
    pooled = jnp.dot(onehot, emb_ref[...],
                     preferred_element_type=jnp.float32)               # (K, E)

    pooled_bf = pooled.astype(jnp.bfloat16)
    acc = b1_ref[...]                                                  # (1, H)
    # Statically unrolled over the (small) number of keys: K tiny MXU matmuls,
    # avoids any (K, E) -> (1, K*E) sublane->lane relayout inside the kernel.
    for k in range(num_keys):
        acc = acc + jnp.dot(pooled_bf[k:k + 1, :],
                            w1s_ref[k * emb_dim:(k + 1) * emb_dim, :],
                            preferred_element_type=jnp.float32)
    out_ref[...] = acc


def pooled_projection(seg_ids, gathered, w1_sparse_bf, b1, num_keys):
    """seg_ids: (1, L) int32 segment id per row; gathered: (L, E) f32;
    w1_sparse_bf: (K*E, H) bf16; b1: (1, H) f32.  Returns (1, H) f32."""
    total_len, emb_dim = gathered.shape
    hidden = w1_sparse_bf.shape[1]
    # TODO(synk): at production total_len, tile the grid over total_len chunks and
    # accumulate the one-hot matmul into a VMEM scratch instead of one full block.
    kernel = functools.partial(_pool_project_kernel, num_keys=num_keys)
    return pl.pallas_call(
        kernel,
        out_shape=jax.ShapeDtypeStruct((1, hidden), jnp.float32),
        grid=(1,),
        in_specs=[
            pl.BlockSpec((1, total_len), lambda i: (0, 0)),
            pl.BlockSpec((total_len, emb_dim), lambda i: (0, 0)),
            pl.BlockSpec((num_keys * emb_dim, hidden), lambda i: (0, 0)),
            pl.BlockSpec((1, hidden), lambda i: (0, 0)),
        ],
        out_specs=pl.BlockSpec((1, hidden), lambda i: (0, 0)),
        compiler_params=pltpu.CompilerParams(
            dimension_semantics=("arbitrary",),
            vmem_limit_bytes=_VMEM_LIMIT,
        ),
    )(seg_ids, gathered, w1_sparse_bf, b1)


# ----------------------------------------------------------------------------
# Kernel 2: fused ranking MLP, batch-tiled.
#   h = relu(dense @ W1_dense + sparse_bias); score = sigmoid(h . w2 + b2)
# First matmul in bf16 (f32 accumulate); the N=1 head is a VPU/XLU reduction
# instead of pushing one column through the MXU; b2 is a 1-D SMEM scalar.
# ----------------------------------------------------------------------------
def _mlp_kernel(dense_ref, w1d_ref, sbias_ref, w2_ref, b2_ref, o_ref):
    dense_bf = dense_ref[...].astype(jnp.bfloat16)
    h = jnp.dot(dense_bf, w1d_ref[...], preferred_element_type=jnp.float32)  # (TB, H)
    h = jnp.maximum(h + sbias_ref[...], 0.0)

    logit = jnp.sum(h * w2_ref[...], axis=-1, keepdims=True) + b2_ref[0]     # (TB, 1)
    # TODO(synk): for very large B the (TB, 1) store is masked/partial; a
    # lane-dense (1, B) output layout would make stores unmasked, at the cost
    # of an in-kernel sublane->lane relayout of the logits.
    o_ref[...] = jax.nn.sigmoid(logit)


def mlp_forward(dense, w1_dense_bf, sparse_bias, w2_row, b2, *, tile_b=256):
    B, dd = dense.shape
    H = w1_dense_bf.shape[1]

    TB = B if B <= tile_b else tile_b
    pad = (-B) % TB
    if pad:
        dense = jnp.pad(dense, ((0, pad), (0, 0)))
    Bp = B + pad

    out = pl.pallas_call(
        _mlp_kernel,
        out_shape=jax.ShapeDtypeStruct((Bp, 1), jnp.float32),
        grid=(Bp // TB,),
        in_specs=[
            pl.BlockSpec((TB, dd), lambda i: (i, 0)),      # per-tile dense rows
            pl.BlockSpec((dd, H), lambda i: (0, 0)),       # bf16 weights, resident
            pl.BlockSpec((1, H), lambda i: (0, 0)),        # fused sparse bias
            pl.BlockSpec((1, H), lambda i: (0, 0)),        # head weights (f32)
            pl.BlockSpec(memory_space=pltpu.MemorySpace.SMEM),  # b2 scalar (1-D)
        ],
        out_specs=pl.BlockSpec((TB, 1), lambda i: (i, 0)),
        compiler_params=pltpu.CompilerParams(
            dimension_semantics=("parallel",),   # batch tiles shard across v7x cores
            vmem_limit_bytes=_VMEM_LIMIT,
        ),
    )(dense, w1_dense_bf, sparse_bias, w2_row, b2)
    return out[:B]


# ----------------------------------------------------------------------------
# KeyedJaggedTensor stand-in (values = concatenated ids, lengths per key).
# Lengths are host-static Python ints (the wrapper computes len(v)), so we keep
# them as such to avoid any device->host sync.
# ----------------------------------------------------------------------------
class KeyedJaggedTensor:
    def __init__(self, keys, values, lengths):
        self.keys = list(keys)
        self.values = values  # jnp int32 (sum(lengths),)
        if isinstance(lengths, (list, tuple)):
            self.length_per_key = tuple(int(l) for l in lengths)
        else:
            self.length_per_key = tuple(int(l) for l in np.asarray(lengths))
        self.lengths = jnp.asarray(self.length_per_key, jnp.int32)

    def to(self, *args, **kwargs):  # device placement is a no-op in JAX here
        return self


# ----------------------------------------------------------------------------
# Synthetic GRRankingModel (deterministic params)
# ----------------------------------------------------------------------------
class GRRankingModel:
    def __init__(self, keys, vocab_size=64, emb_dim=16, dense_dim=8, hidden=128):
        self.keys = list(keys)
        self.emb_dim = emb_dim
        self.dense_dim = dense_dim
        k0 = jax.random.PRNGKey(42)
        ks = jax.random.split(k0, len(self.keys) + 4)
        self.emb_tables = {
            key: 0.05 * jax.random.normal(ks[i], (vocab_size, emb_dim), jnp.float32)
            for i, key in enumerate(self.keys)
        }
        feat_dim = dense_dim + len(self.keys) * emb_dim
        self.w1 = 0.1 * jax.random.normal(ks[-4], (feat_dim, hidden), jnp.float32)
        self.b1 = 0.01 * jax.random.normal(ks[-3], (1, hidden), jnp.float32)
        self.w2 = 0.1 * jax.random.normal(ks[-2], (hidden, 1), jnp.float32)
        self.b2 = 0.01 * jax.random.normal(ks[-1], (1, 1), jnp.float32)
        # Pre-split and pre-cast W1 so the pooled-feature broadcast+concat fuses
        # into the kernels and the weight DMA is half-width bf16.
        self.w1_dense_bf = self.w1[:dense_dim].astype(jnp.bfloat16)
        self.w1_sparse_bf = self.w1[dense_dim:].astype(jnp.bfloat16)
        self.w2_row = self.w2.reshape(1, hidden)
        self.b2_smem = self.b2.reshape((1,))

    def __call__(self, feat):
        dense = feat["dense"].astype(jnp.float32)              # (B, dense_dim)
        kjt = feat["sparse"]
        lengths = kjt.length_per_key                           # static ints: no device sync
        offsets = np.concatenate([[0], np.cumsum(lengths)]).astype(np.int64)

        # Glue: embedding gather per key (XLA gather), concatenated rows.
        # TODO(synk): a Pallas scalar-prefetch gather (pl.Element row blocks)
        # could replace this XLA gather for very long id lists.
        gathered = []
        for i, key in enumerate(kjt.keys):
            ids = jax.lax.slice_in_dim(kjt.values, int(offsets[i]), int(offsets[i + 1]))
            gathered.append(jnp.take(self.emb_tables[key], ids, axis=0))
        gathered = jnp.concatenate(gathered, axis=0)           # (total_len, E)

        seg = jnp.asarray(
            np.repeat(np.arange(len(kjt.keys), dtype=np.int32), lengths), jnp.int32
        ).reshape(1, -1)                                       # (1, total_len)

        sparse_bias = pooled_projection(seg, gathered, self.w1_sparse_bf, self.b1,
                                        num_keys=len(kjt.keys))          # (1, H)
        return mlp_forward(dense, self.w1_dense_bf, sparse_bias,
                           self.w2_row, self.b2_smem)                    # (B, 1)


# ----------------------------------------------------------------------------
# GRRankingWrappedModel — mirrors the PyTorch wrapper's forward semantics
# ----------------------------------------------------------------------------
class GRRankingWrappedModel:
    def __init__(self, model, model_input_names, kjt_name_map):
        self.model = model
        self.model_input_names = model_input_names
        self.kjt_name_map = kjt_name_map

    def forward(self, inputs):
        feat = {}
        inputs = list(inputs)
        idx = 0
        for name in self.model_input_names:
            if name in self.kjt_name_map.keys():
                keys = [t[0] for t in self.kjt_name_map[name]]
                values = [inputs[t[1]] for t in self.kjt_name_map[name]]
                lens = [len(v) for v in values]
                feat[name] = KeyedJaggedTensor(
                    keys=keys,
                    values=jnp.concatenate(values),
                    lengths=lens,
                )  # .to('cuda:0') -> no-op; JAX arrays already on default device
                idx += len(keys)
            else:
                feat[name] = inputs[idx]
                idx += 1
        return self.model(feat)


# ----------------------------------------------------------------------------
# Pure-JAX (f32) reference for correctness
# ----------------------------------------------------------------------------
def reference_forward(model, dense, id_lists):
    pooled = [jnp.sum(jnp.take(model.emb_tables[k], ids, axis=0), axis=0)
              for k, ids in zip(model.keys, id_lists)]
    sparse = jnp.concatenate(pooled).reshape(1, -1)
    x = jnp.concatenate(
        [dense, jnp.broadcast_to(sparse, (dense.shape[0], sparse.shape[1]))], axis=1)
    h = jnp.maximum(x @ model.w1 + model.b1, 0.0)
    return jax.nn.sigmoid(h @ model.w2 + model.b2)


if __name__ == "__main__":
    B, DENSE_DIM, EMB_DIM, HIDDEN, VOCAB = 8, 8, 16, 128, 64
    key = jax.random.PRNGKey(0)
    k_dense, k1, k2, k3 = jax.random.split(key, 4)

    dense = jax.random.normal(k_dense, (B, DENSE_DIM), jnp.float32)
    item_ids = jax.random.randint(k1, (5,), 0, VOCAB, jnp.int32)
    user_ids = jax.random.randint(k2, (3,), 0, VOCAB, jnp.int32)
    cate_ids = jax.random.randint(k3, (7,), 0, VOCAB, jnp.int32)

    model_input_names = ["dense", "sparse"]
    kjt_name_map = {"sparse": [("item_id", 1), ("user_id", 2), ("cate_id", 3)]}

    inner = GRRankingModel(
        keys=[t[0] for t in kjt_name_map["sparse"]],
        vocab_size=VOCAB, emb_dim=EMB_DIM, dense_dim=DENSE_DIM, hidden=HIDDEN,
    )
    wrapped = GRRankingWrappedModel(inner, model_input_names, kjt_name_map)

    out = wrapped.forward([dense, item_ids, user_ids, cate_ids])
    out = jax.block_until_ready(out)

    ref = reference_forward(inner, dense, [item_ids, user_ids, cate_ids])
    assert out.shape == (B, 1)
    # Kernels use bf16 inputs for the hidden-layer matmuls (f32 accumulate);
    # compare against the pure-f32 reference with a bf16-rounding tolerance.
    np.testing.assert_allclose(np.asarray(out), np.asarray(ref), rtol=2e-2, atol=2e-3)

    print("KERNEL_OK")
</pallas_src>

<mosaic_0001>
module attributes {stable_mosaic.version = 11 : i64} {
  func.func @_pool_project_kernel(%arg0: i32, %arg1: memref<1x15xi32, #tpu.memory_space<vmem>>, %arg2: memref<15x16xf32, #tpu.memory_space<vmem>>, %arg3: memref<48x128xbf16, #tpu.memory_space<vmem>>, %arg4: memref<1x128xf32, #tpu.memory_space<vmem>>, %arg5: memref<1x128xf32, #tpu.memory_space<vmem>>) attributes {dimension_semantics = [#tpu.dimension_semantics<arbitrary>], iteration_bounds = array<i64: 1>, scalar_prefetch = 0 : i64, scratch_operands = 0 : i64, tpu.core_type = #tpu.core_type<tc>, window_params = [{pipeline_mode = #tpu.pipeline_mode<synchronous>, transform_indices = @transform_0, window_bounds = array<i64: 1, 15>}, {pipeline_mode = #tpu.pipeline_mode<synchronous>, transform_indices = @transform_1, window_bounds = array<i64: 15, 16>}, {pipeline_mode = #tpu.pipeline_mode<synchronous>, transform_indices = @transform_2, window_bounds = array<i64: 48, 128>}, {pipeline_mode = #tpu.pipeline_mode<synchronous>, transform_indices = @transform_3, window_bounds = array<i64: 1, 128>}, {pipeline_mode = #tpu.pipeline_mode<synchronous>, transform_indices = @transform_4, window_bounds = array<i64: 1, 128>}]} {
    %0 = tpu.iota {dimensions = array<i32: 0>} : vector<3x15xi32>
    %c0 = arith.constant 0 : index
    %c0_0 = arith.constant 0 : index
    %1 = vector.load %arg1[%c0, %c0_0] : memref<1x15xi32, #tpu.memory_space<vmem>>, vector<1x15xi32>
    %2 = vector.broadcast %1 : vector<1x15xi32> to vector<3x15xi32>
    %3 = arith.cmpi eq, %0, %2 : vector<3x15xi32>
    %4 = arith.extui %3 : vector<3x15xi1> to vector<3x15xi32>
    %5 = arith.sitofp %4 : vector<3x15xi32> to vector<3x15xf32>
    %c0_1 = arith.constant 0 : index
    %c0_2 = arith.constant 0 : index
    %6 = vector.load %arg2[%c0_1, %c0_2] : memref<15x16xf32, #tpu.memory_space<vmem>>, vector<15x16xf32>
    %cst = arith.constant dense<0.000000e+00> : vector<3x16xf32>
    %7 = tpu.matmul %5, %6, %cst {dimension_numbers = #tpu.dot_dimension_numbers<[1], [0], [0], [1], [0, 0, 1, 1], [], []>} : vector<3x15xf32>, vector<15x16xf32>, vector<3x16xf32> -> vector<3x16xf32>
    %8 = arith.truncf %7 : vector<3x16xf32> to vector<3x16xbf16>
    %c0_3 = arith.constant 0 : index
    %c0_4 = arith.constant 0 : index
    %9 = vector.load %arg4[%c0_3, %c0_4] : memref<1x128xf32, #tpu.memory_space<vmem>>, vector<1x128xf32>
    %10 = vector.extract_strided_slice %8 {offsets = [0, 0], sizes = [1, 16], strides = [1, 1]} : vector<3x16xbf16> to vector<1x16xbf16>
    %c0_5 = arith.constant 0 : index
    %c0_6 = arith.constant 0 : index
    %11 = vector.load %arg3[%c0_5, %c0_6] : memref<48x128xbf16, #tpu.memory_space<vmem>>, vector<16x128xbf16>
    %cst_7 = arith.constant dense<0.000000e+00> : vector<1x128xf32>
    %12 = tpu.matmul %10, %11, %cst_7 {dimension_numbers = #tpu.dot_dimension_numbers<[1], [0], [0], [1], [0, 0, 1, 1], [], []>} : vector<1x16xbf16>, vector<16x128xbf16>, vector<1x128xf32> -> vector<1x128xf32>
    %13 = arith.addf %9, %12 : vector<1x128xf32>
    %14 = vector.extract_strided_slice %8 {offsets = [1, 0], sizes = [1, 16], strides = [1, 1]} : vector<3x16xbf16> to vector<1x16xbf16>
    %c16 = arith.constant 16 : index
    %c0_8 = arith.constant 0 : index
    %15 = vector.load %arg3[%c16, %c0_8] : memref<48x128xbf16, #tpu.memory_space<vmem>>, vector<16x128xbf16>
    %cst_9 = arith.constant dense<0.000000e+00> : vector<1x128xf32>
    %16 = tpu.matmul %14, %15, %cst_9 {dimension_numbers = #tpu.dot_dimension_numbers<[1], [0], [0], [1], [0, 0, 1, 1], [], []>} : vector<1x16xbf16>, vector<16x128xbf16>, vector<1x128xf32> -> vector<1x128xf32>
    %17 = arith.addf %13, %16 : vector<1x128xf32>
    %18 = vector.extract_strided_slice %8 {offsets = [2, 0], sizes = [1, 16], strides = [1, 1]} : vector<3x16xbf16> to vector<1x16xbf16>
    %c32 = arith.constant 32 : index
    %c0_10 = arith.constant 0 : index
    %19 = vector.load %arg3[%c32, %c0_10] : memref<48x128xbf16, #tpu.memory_space<vmem>>, vector<16x128xbf16>
    %cst_11 = arith.constant dense<0.000000e+00> : vector<1x128xf32>
    %20 = tpu.matmul %18, %19, %cst_11 {dimension_numbers = #tpu.dot_dimension_numbers<[1], [0], [0], [1], [0, 0, 1, 1], [], []>} : vector<1x16xbf16>, vector<16x128xbf16>, vector<1x128xf32> -> vector<1x128xf32>
    %21 = arith.addf %17, %20 : vector<1x128xf32>
    %c0_12 = arith.constant 0 : index
    %c0_13 = arith.constant 0 : index
    %22 = vector.load %arg5[%c0_12, %c0_13] : memref<1x128xf32, #tpu.memory_space<vmem>>, vector<1x128xf32>
    tpu.vector_store %arg5[%c0_12, %c0_13], %21 {strides = array<i32>} : memref<1x128xf32, #tpu.memory_space<vmem>>, vector<1x128xf32>,
    return
  }
  func.func @transform_0(%arg0: i32) -> (i32, i32) {
    %c0_i32 = arith.constant 0 : i32
    %c0_i32_0 = arith.constant 0 : i32
    %c0_i32_1 = arith.constant 0 : i32
    return %c0_i32, %c0_i32_0 : i32, i32
  }
  func.func @transform_1(%arg0: i32) -> (i32, i32) {
    %c0_i32 = arith.constant 0 : i32
    %c0_i32_0 = arith.constant 0 : i32
    %c0_i32_1 = arith.constant 0 : i32
    return %c0_i32, %c0_i32_0 : i32, i32
  }
  func.func @transform_2(%arg0: i32) -> (i32, i32) {
    %c0_i32 = arith.constant 0 : i32
    %c0_i32_0 = arith.constant 0 : i32
    %c0_i32_1 = arith.constant 0 : i32
    return %c0_i32, %c0_i32_0 : i32, i32
  }
  func.func @transform_3(%arg0: i32) -> (i32, i32) {
    %c0_i32 = arith.constant 0 : i32
    %c0_i32_0 = arith.constant 0 : i32
    %c0_i32_1 = arith.constant 0 : i32
    return %c0_i32, %c0_i32_0 : i32, i32
  }
  func.func @transform_4(%arg0: i32) -> (i32, i32) {
    %c0_i32 = arith.constant 0 : i32
    %c0_i32_0 = arith.constant 0 : i32
    %c0_i32_1 = arith.constant 0 : i32
    return %c0_i32, %c0_i32_0 : i32, i32
  }
}

</mosaic_0001>

<llo_original>
// kernel: tpu_custom_call.1
$region0: #{tpu_custom_call.1}
  #allocation0 [shape = 'u32[]', space=smem, size = 0x4, offset = 0x4, fixed_abs, tag = 'smem constant byte address 0x4 - core index']
  #allocation1 [shape = 'u32[144,128]{1,0:T(1,128)}', space=vmem, size = 0x12000, scoped, tag = 'internal scratch']
  %s0 = inlined_call_operand.hbm [shape: s32[1,15], index: 0, kind: input, shape index: {}]
  %s1 = inlined_call_operand.hbm [shape: f32[15,16], index: 1, kind: input, shape index: {}]
  %s2 = inlined_call_operand.hbm [shape: bf16[48,128], index: 2, kind: input, shape index: {}]
  %s3 = inlined_call_operand.vmem [shape: f32[1,128], index: 3, kind: input, shape index: {}]
  %s4 = inlined_call_operand.hbm [shape: f32[1,128], index: 4, kind: output, shape index: {}]
  %s5 = sld [smem:[#allocation0]]
  $region38: #{tpu_custom_call.1} parent=0
    _
  %s7 = ssub.s32 1, %s5
  %s8 = scalar_select 0, %s7, %s5
  $region1: #{tpu_custom_call.1} parent=0
    #allocation2 [shape = 'u8[512]{0}', space=vmem, size = 0x400, scoped, tag = 'input window, operand 0, single buffered']
    #allocation3 [shape = 's32[1]{0}', space=sflag, size = 0x4, scoped, tag = 'scoped memory for tpu_custom_call.1']
    #allocation4 [shape = 's32[1]{0}', space=sflag, size = 0x4, scoped, tag = 'scoped memory for tpu_custom_call.1']
    #allocation5 [shape = 'u8[8192]{0}', space=vmem, size = 0x2000, scoped, tag = 'input window, operand 1, single buffered']
    #allocation6 [shape = 's32[1]{0}', space=sflag, size = 0x4, scoped, tag = 'scoped memory for tpu_custom_call.1']
    #allocation7 [shape = 'u8[12288]{0}', space=vmem, size = 0x3000, scoped, tag = 'input window, operand 2, single buffered']
    #allocation8 [shape = 'u8[512]{0}', space=vmem, size = 0x400, scoped, tag = 'output window, operand 0, single buffered']
    %9 = vsyncpa [#allocation3], 0
    %10 = vsyncpa [#allocation6], 0
    %11 = vsyncpa [#allocation4], 0
    // Predicated region
    $region2: #{tpu_custom_call.1} parent=1 // pred_check
      _
    $region3: #{tpu_custom_call.1} parent=1 // pred_check_branch
      %13 = sbr.rel (0) target = $region5
    $region4: #{tpu_custom_call.1} parent=1 // pred_region
      %s15 = ssub.s32 16, 16
      %16 = vsyncadd [#allocation3], %s15
      %s18 = sshll.u32 [#allocation2], 4
      %s19 = int_to_ptr.vmem [resolvable:$true] %s18
      %21 = dma.hbm_to_vmem [thread:$0]  %s0, 16, %s19, [#allocation3]
    $region5: #{tpu_custom_call.1} parent=1 // pred_fallthru
      _
    // Predicated region
    $region6: #{tpu_custom_call.1} parent=1 // pred_check
      _
    $region7: #{tpu_custom_call.1} parent=1 // pred_check_branch
      %23 = sbr.rel (0) target = $region9
    $region8: #{tpu_custom_call.1} parent=1 // pred_region
      %s25 = ssub.s32 256, 256
      %26 = vsyncadd [#allocation6], %s25
      %s27 = sshll.u32 [#allocation5], 4
      %s28 = int_to_ptr.vmem [resolvable:$true] %s27
      %33 = dma.hbm_to_vmem [thread:$0]  %s1, 256, %s28, [#allocation6], 128, 128, 8
    $region9: #{tpu_custom_call.1} parent=1 // pred_fallthru
      _
    // Predicated region
    $region10: #{tpu_custom_call.1} parent=1 // pred_check
      _
    $region11: #{tpu_custom_call.1} parent=1 // pred_check_branch
      %35 = sbr.rel (0) target = $region13
    $region12: #{tpu_custom_call.1} parent=1 // pred_region
      %s37 = ssub.s32 384, 384
      %38 = vsyncadd [#allocation6], %s37
      %s39 = sshll.u32 [#allocation7], 4
      %s40 = int_to_ptr.vmem [resolvable:$true] %s39
      %45 = dma.hbm_to_vmem [thread:$0]  %s2, 384, %s40, [#allocation6], 64, 64, 4
    $region13: #{tpu_custom_call.1} parent=1 // pred_fallthru
      _
    // Predicated region
    $region14: #{tpu_custom_call.1} parent=1 // pred_check
      _
    $region15: #{tpu_custom_call.1} parent=1 // pred_check_branch
      %47 = sbr.rel (0) target = $region17
    $region16: #{tpu_custom_call.1} parent=1 // pred_region
      _
    $region17: #{tpu_custom_call.1} parent=1 // pred_fallthru
      _
    // Predicated region
    $region18: #{tpu_custom_call.1} parent=1 // pred_check
      _
    $region19: #{tpu_custom_call.1} parent=1 // pred_check_branch
      %49 = sbr.rel (0) target = $region21
    $region20: #{tpu_custom_call.1} parent=1 // pred_region
      %50 = dma.done [#allocation3], 16
    $region21: #{tpu_custom_call.1} parent=1 // pred_fallthru
      _
    // Predicated region
    $region22: #{tpu_custom_call.1} parent=1 // pred_check
      _
    $region23: #{tpu_custom_call.1} parent=1 // pred_check_branch
      %52 = sbr.rel (0) target = $region25
    $region24: #{tpu_custom_call.1} parent=1 // pred_region
      %53 = dma.done [#allocation6], 256
    $region25: #{tpu_custom_call.1} parent=1 // pred_fallthru
      _
    // Predicated region
    $region26: #{tpu_custom_call.1} parent=1 // pred_check
      _
    $region27: #{tpu_custom_call.1} parent=1 // pred_check_branch
      %55 = sbr.rel (0) target = $region29
    $region28: #{tpu_custom_call.1} parent=1 // pred_region
      %56 = dma.done [#allocation6], 384
    $region29: #{tpu_custom_call.1} parent=1 // pred_fallthru
      _
    %v58 = vlaneseq
    %v59 = vshrl.u32 %v58, 7
    %v60 = vld [vmem:[#allocation2] sm:$0x1]
    %v61 = vlaneseq
    %v62 = vshrl.u32 %v61, 7
    %v63 = vsub.s32 0, %v62
    %v64 = vrot.slane %v60, %v63
    %vm65 = vcmp.eq.s32.totalorder %v59, %v64
    %v66 = vsel %vm65, 1, 0
    %v67 = vcvt.s32.f32 %v66
    %v68 = vld [vmem:[#allocation5] sm:$0xff]
    %v69 = vld [vmem:[#allocation5 + $0x8] sm:$0x7f]
    %vm70 = vcmask 121856
    %v72 = vsel %vm70, %v67, 0
    %vm74 = vcmask 1046528
    %v76 = vsel %vm74, %v69, 0
    %78 = vmatprep.subr.mxu0 0.0
    %79 = vmatpush1.msra.mxu0 %v68
    %80 = vmatprep.subr.mxu0 0.0
    %81 = vmatpush1.msra.mxu0 %v76
    %82 = vmatprep.subr.mxu0 0.0
    %83 = vmatpush1.msra.mxu0 0.0
    %84 = vmatprep.subr.mxu0 0.0
    %85 = vmatpush1.msra.mxu0 0.0
    %86 = vmatprep.subr.mxu0 0.0
    %87 = vmatpush1.msra.mxu0 0.0
    %88 = vmatprep.subr.mxu0 0.0
    %89 = vmatpush1.msra.mxu0 0.0
    %90 = vmatprep.subr.mxu0 0.0
    %91 = vmatpush1.msra.mxu0 0.0
    %92 = vmatprep.subr.mxu0 0.0
    %93 = vmatpush1.msra.mxu0 0.0
    %94 = vmatprep.subr.mxu0 0.0
    %95 = vmatpush1.msra.mxu0 0.0
    %96 = vmatprep.subr.mxu0 0.0
    %97 = vmatpush1.msra.mxu0 0.0
    %98 = vmatprep.subr.mxu0 0.0
    %99 = vmatpush1.msra.mxu0 0.0
    %100 = vmatprep.subr.mxu0 0.0
    %101 = vmatpush1.msra.mxu0 0.0
    %102 = vmatprep.subr.mxu0 0.0
    %103 = vmatpush1.msra.mxu0 0.0
    %104 = vmatprep.subr.mxu0 0.0
    %105 = vmatpush1.msra.mxu0 0.0
    %106 = vmatprep.subr.mxu0 0.0
    %107 = vmatpush1.msra.mxu0 0.0
    %108 = vmatprep.subr.mxu0 0.0
    %109 = vmatpush1.msra.mxu0 0.0
    %110 = vmatprep.subr.mxu0 0.0
    %111 = vmatpush1.msra.mxu0 0.0
    %112 = vmatprep.subr.mxu0 0.0
    %113 = vmatpush1.msra.mxu0 0.0
    %114 = vmatprep.subr.mxu0 0.0
    %115 = vmatpush1.msra.mxu0 0.0
    %116 = vmatprep.subr.mxu0 0.0
    %117 = vmatpush1.msra.mxu0 0.0
    %118 = vmatprep.subr.mxu0 0.0
    %119 = vmatpush1.msra.mxu0 0.0
    %120 = vmatprep.subr.mxu0 0.0
    %121 = vmatpush1.msra.mxu0 0.0
    %122 = vmatprep.subr.mxu0 0.0
    %123 = vmatpush1.msra.mxu0 0.0
    %124 = vmatprep.subr.mxu0 0.0
    %125 = vmatpush1.msra.mxu0 0.0
    %126 = vmatprep.subr.mxu0 0.0
    %127 = vmatpush1.msra.mxu0 0.0
    %128 = vmatprep.subr.mxu0 0.0
    %129 = vmatpush1.msra.mxu0 0.0
    %130 = vmatprep.subr.mxu0 0.0
    %131 = vmatpush1.msra.mxu0 0.0
    %132 = vmatprep.subr.mxu0 0.0
    %133 = vmatpush1.msra.mxu0 0.0
    %134 = vmatprep.subr.mxu0 0.0
    %135 = vmatpush1.msra.mxu0 0.0
    %136 = vmatprep.subr.mxu0 0.0
    %137 = vmatpush1.msra.mxu0 0.0
    %138 = vmatprep.subr.mxu0 0.0
    %139 = vmatpush1.msra.mxu0 0.0
    %140 = vmatprep.subr.mxu0 0.0
    %141 = vmatpush1.msra.mxu0 0.0
    %142 = vmatprep.mubr.f32.mxu0 0.0
    %143 = vmatmul.mubr.f32.gmra.mrb[0].mxu0 %v72
    %v144 = vpop.f32.mrb[0].mxu0
    %v145 = vadd.f32 0.0, %v144
    %v146 = vpop.f32.mrb[0].mxu0
    %147 = vdwg.mxu0
    %v148 = vpack.c.bf16 %v145, %v145
    %v149 = vld [vmem:[%s3] sm:$0x1]
    %v150 = vld [vmem:[#allocation7] sm:$0xf]
    %v151 = vld [vmem:[#allocation7 + $0x4] sm:$0xf]
    %v154 = vunpack.c.l.b16 %v150
    %v155 = vunpack.c.l.b16 %v151
    %v156 = vpack.c.b16 %v155, %v154
    %vm158 = vcmask 130048
    %v160 = vsel %vm158, %v148, 0
    %162 = vmatprep.subr.bf16.mxu0 0
    %163 = vmatpush1.bf16.msra.mxu0 %v156
    %164 = vmatprep.subr.bf16.mxu0 0
    %165 = vmatpush1.bf16.msra.mxu0 0
    %166 = vmatprep.subr.bf16.mxu0 0
    %167 = vmatpush1.bf16.msra.mxu0 0
    %168 = vmatprep.subr.bf16.mxu0 0
    %169 = vmatpush1.bf16.msra.mxu0 0
    %170 = vmatprep.subr.bf16.mxu0 0
    %171 = vmatpush1.bf16.msra.mxu0 0
    %172 = vmatprep.subr.bf16.mxu0 0
    %173 = vmatpush1.bf16.msra.mxu0 0
    %174 = vmatprep.subr.bf16.mxu0 0
    %175 = vmatpush1.bf16.msra.mxu0 0
    %176 = vmatprep.subr.bf16.mxu0 0
    %177 = vmatpush1.bf16.msra.mxu0 0
    %178 = vmatprep.subr.bf16.mxu0 0
    %179 = vmatpush1.bf16.msra.mxu0 0
    %180 = vmatprep.subr.bf16.mxu0 0
    %181 = vmatpush1.bf16.msra.mxu0 0
    %182 = vmatprep.subr.bf16.mxu0 0
    %183 = vmatpush1.bf16.msra.mxu0 0
    %184 = vmatprep.subr.bf16.mxu0 0
    %185 = vmatpush1.bf16.msra.mxu0 0
    %186 = vmatprep.subr.bf16.mxu0 0
    %187 = vmatpush1.bf16.msra.mxu0 0
    %188 = vmatprep.subr.bf16.mxu0 0
    %189 = vmatpush1.bf16.msra.mxu0 0
    %190 = vmatprep.subr.bf16.mxu0 0
    %191 = vmatpush1.bf16.msra.mxu0 0
    %192 = vmatprep.subr.bf16.mxu0 0
    %193 = vmatpush1.bf16.msra.mxu0 0
    %194 = vmatprep.mubr.bf16.mxu0 0
    %195 = vmatmul.mubr.bf16.gmra.mrb[0].mxu0 %v160
    %v196 = vpop.f32.mrb[0].mxu0
    %v197 = vadd.f32 0.0, %v196
    %v198 = vpop.f32.mrb[0].mxu0
    %v199 = vpop.f32.mrb[0].mxu0
    %v200 = vpop.f32.mrb[0].mxu0
    %201 = vdwg.mxu0
    %v202 = vadd.f32 %v149, %v197
    %v203 = vld [vmem:[#allocation7 + $0x8] sm:$0xf]
    %v204 = vld [vmem:[#allocation7 + $0xc] sm:$0xf]
    %v205 = vshrl.u32 %v148, 16
    %v209 = vunpack.c.l.b16 %v203
    %v210 = vunpack.c.l.b16 %v204
    %v211 = vpack.c.b16 %v210, %v209
    %v214 = vsel %vm158, %v205, 0
    %216 = vmatprep.subr.bf16.mxu0 0
    %217 = vmatpush1.bf16.msra.mxu0 %v211
    %218 = vmatprep.subr.bf16.mxu0 0
    %219 = vmatpush1.bf16.msra.mxu0 0
    %220 = vmatprep.subr.bf16.mxu0 0
    %221 = vmatpush1.bf16.msra.mxu0 0
    %222 = vmatprep.subr.bf16.mxu0 0
    %223 = vmatpush1.bf16.msra.mxu0 0
    %224 = vmatprep.subr.bf16.mxu0 0
    %225 = vmatpush1.bf16.msra.mxu0 0
    %226 = vmatprep.subr.bf16.mxu0 0
    %227 = vmatpush1.bf16.msra.mxu0 0
    %228 = vmatprep.subr.bf16.mxu0 0
    %229 = vmatpush1.bf16.msra.mxu0 0
    %230 = vmatprep.subr.bf16.mxu0 0
    %231 = vmatpush1.bf16.msra.mxu0 0
    %232 = vmatprep.subr.bf16.mxu0 0
    %233 = vmatpush1.bf16.msra.mxu0 0
    %234 = vmatprep.subr.bf16.mxu0 0
    %235 = vmatpush1.bf16.msra.mxu0 0
    %236 = vmatprep.subr.bf16.mxu0 0
    %237 = vmatpush1.bf16.msra.mxu0 0
    %238 = vmatprep.subr.bf16.mxu0 0
    %239 = vmatpush1.bf16.msra.mxu0 0
    %240 = vmatprep.subr.bf16.mxu0 0
    %241 = vmatpush1.bf16.msra.mxu0 0
    %242 = vmatprep.subr.bf16.mxu0 0
    %243 = vmatpush1.bf16.msra.mxu0 0
    %244 = vmatprep.subr.bf16.mxu0 0
    %245 = vmatpush1.bf16.msra.mxu0 0
    %246 = vmatprep.subr.bf16.mxu0 0
    %247 = vmatpush1.bf16.msra.mxu0 0
    %248 = vmatprep.mubr.bf16.mxu0 0
    %249 = vmatmul.mubr.bf16.gmra.mrb[0].mxu0 %v214
    %v250 = vpop.f32.mrb[0].mxu0
    %v251 = vadd.f32 0.0, %v250
    %v252 = vpop.f32.mrb[0].mxu0
    %v253 = vpop.f32.mrb[0].mxu0
    %v254 = vpop.f32.mrb[0].mxu0
    %255 = vdwg.mxu0
    %v256 = vadd.f32 %v202, %v251
    %v257 = vld [vmem:[#allocation7 + $0x10] sm:$0xf]
    %v258 = vld [vmem:[#allocation7 + $0x14] sm:$0xf]
    %v260 = vrot.slane %v148, 1
    %v263 = vunpack.c.l.b16 %v257
    %v264 = vunpack.c.l.b16 %v258
    %v265 = vpack.c.b16 %v264, %v263
    %v268 = vsel %vm158, %v260, 0
    %270 = vmatprep.subr.bf16.mxu0 0
    %271 = vmatpush1.bf16.msra.mxu0 %v265
    %272 = vmatprep.subr.bf16.mxu0 0
    %273 = vmatpush1.bf16.msra.mxu0 0
    %274 = vmatprep.subr.bf16.mxu0 0
    %275 = vmatpush1.bf16.msra.mxu0 0
    %276 = vmatprep.subr.bf16.mxu0 0
    %277 = vmatpush1.bf16.msra.mxu0 0
    %278 = vmatprep.subr.bf16.mxu0 0
    %279 = vmatpush1.bf16.msra.mxu0 0
    %280 = vmatprep.subr.bf16.mxu0 0
    %281 = vmatpush1.bf16.msra.mxu0 0
    %282 = vmatprep.subr.bf16.mxu0 0
    %283 = vmatpush1.bf16.msra.mxu0 0
    %284 = vmatprep.subr.bf16.mxu0 0
    %285 = vmatpush1.bf16.msra.mxu0 0
    %286 = vmatprep.subr.bf16.mxu0 0
    %287 = vmatpush1.bf16.msra.mxu0 0
    %288 = vmatprep.subr.bf16.mxu0 0
    %289 = vmatpush1.bf16.msra.mxu0 0
    %290 = vmatprep.subr.bf16.mxu0 0
    %291 = vmatpush1.bf16.msra.mxu0 0
    %292 = vmatprep.subr.bf16.mxu0 0
    %293 = vmatpush1.bf16.msra.mxu0 0
    %294 = vmatprep.subr.bf16.mxu0 0
    %295 = vmatpush1.bf16.msra.mxu0 0
    %296 = vmatprep.subr.bf16.mxu0 0
    %297 = vmatpush1.bf16.msra.mxu0 0
    %298 = vmatprep.subr.bf16.mxu0 0
    %299 = vmatpush1.bf16.msra.mxu0 0
    %300 = vmatprep.subr.bf16.mxu0 0
    %301 = vmatpush1.bf16.msra.mxu0 0
    %302 = vmatprep.mubr.bf16.mxu0 0
    %303 = vmatmul.mubr.bf16.gmra.mrb[0].mxu0 %v268
    %v304 = vpop.f32.mrb[0].mxu0
    %v305 = vadd.f32 0.0, %v304
    %v306 = vpop.f32.mrb[0].mxu0
    %v307 = vpop.f32.mrb[0].mxu0
    %v308 = vpop.f32.mrb[0].mxu0
    %309 = vdwg.mxu0
    %v310 = vadd.f32 %v256, %v305
    %311 = vst [vmem:[#allocation8] sm:$0x1] %v310
    // Predicated region
    $region30: #{tpu_custom_call.1} parent=1 // pred_check
      _
    $region31: #{tpu_custom_call.1} parent=1 // pred_check_branch
      %313 = sbr.rel (0) target = $region33
    $region32: #{tpu_custom_call.1} parent=1 // pred_region
      %s315 = ssub.s32 16, 16
      %316 = vsyncadd [#allocation4], %s315
      %s318 = sshll.u32 [#allocation8], 4
      %s319 = int_to_ptr.vmem [resolvable:$true] %s318
      %321 = dma.vmem_to_hbm [thread:$0]  %s319, 16, %s4, [#allocation4]
    $region33: #{tpu_custom_call.1} parent=1 // pred_fallthru
      _
    // Predicated region
    $region34: #{tpu_custom_call.1} parent=1 // pred_check
      _
    $region35: #{tpu_custom_call.1} parent=1 // pred_check_branch
      %323 = sbr.rel (0) target = $region37
    $region36: #{tpu_custom_call.1} parent=1 // pred_region
      %324 = dma.done [#allocation4], 16
    $region37: #{tpu_custom_call.1} parent=1 // pred_fallthru
      _
    %325 = vsyncpa [#allocation3], 1
    %326 = vsyncpa [#allocation6], 1
    %327 = vsyncpa [#allocation4], 1

</llo_original>
